<compile_context>
chip_gen: v6e
topology: v6e:2x2x1
jax: 0.10.0
libtpu: 0.0.40
codegen_flags: <defaults>
</compile_context>

<pallas_src>
import math
import jax
import jax.numpy as jnp
from jax.experimental import pallas as pl
from jax.experimental.pallas import tpu as pltpu

D_MODEL = 32
VOCAB   = 128
MAX_LEN = 1000


# ------------------------------ kernel ------------------------------

def embedding_kernel(ids_ref, table_ref, pos_ref, out_ref):
    """ids_ref: SMEM (n_tokens,) int32
       table_ref: VMEM (vocab, d_model) f32
       pos_ref:   VMEM (seq, d_model)  f32
       out_ref:   VMEM (n_tokens, d_model) f32  (n_tokens = bs * seq, row-major)"""
    n_tokens = out_ref.shape[0]
    seq_len  = pos_ref.shape[0]
    d_model  = table_ref.shape[1]
    scale    = math.sqrt(d_model)

    # TODO(synk): Dropout(p=0.1) omitted -- deterministic / eval-mode forward.
    for t in range(n_tokens):                          # static unroll (n_tokens is tiny)
        tok = ids_ref[t]                               # scalar int32 from SMEM
        row = table_ref[pl.ds(tok, 1), :]              # exact gather of one row -> (1, d)
        out_ref[pl.ds(t, 1), :] = row * scale + pos_ref[pl.ds(t % seq_len, 1), :]


# ------------------------------ wrapper ------------------------------

def embedding_forward(token_ids, embed_weights, pos_table):
    bs, seq = token_ids.shape
    vocab, d_model = embed_weights.shape
    n_tokens = bs * seq

    ids_flat  = token_ids.reshape(n_tokens).astype(jnp.int32)
    pos_slice = pos_table[:seq]                        # matches torch: position_emb[:seq, :]

    out_flat = pl.pallas_call(
        embedding_kernel,
        out_shape=jax.ShapeDtypeStruct((n_tokens, d_model), jnp.float32),
        in_specs=[
            pl.BlockSpec(memory_space=pltpu.MemorySpace.SMEM),   # token ids (scalars)
            pl.BlockSpec(memory_space=pltpu.MemorySpace.VMEM),   # embedding table
            pl.BlockSpec(memory_space=pltpu.MemorySpace.VMEM),   # positional encodings
        ],
        out_specs=pl.BlockSpec(memory_space=pltpu.MemorySpace.VMEM),
    )(ids_flat, embed_weights, pos_slice)

    return out_flat.reshape(bs, seq, d_model)


# ----------------------- constants & reference -----------------------

def make_position_encoding(max_len, d_model):
    # Mirrors PositionEncoding.__init__ exactly.
    position = jnp.arange(0.0, max_len, dtype=jnp.float32)[:, None]          # (L, 1)
    div_term = jnp.exp(jnp.arange(0, d_model, 2, dtype=jnp.float32)
                       * (-math.log(10000.0) / d_model))                     # (d/2,)
    angles = position * div_term                                             # (L, d/2)
    pe = jnp.zeros((max_len, d_model), jnp.float32)
    pe = pe.at[:, 0::2].set(jnp.sin(angles))
    pe = pe.at[:, 1::2].set(jnp.cos(angles))
    return pe


def ref_forward(token_ids, embed_weights, pos_table):
    d_model = embed_weights.shape[1]
    seq = token_ids.shape[1]
    emb = embed_weights[token_ids]                     # gather (padding_idx keeps stored row)
    emb = emb * (d_model ** 0.5)
    emb = emb + pos_table[:seq][None, :, :]
    return emb                                         # dropout: identity (eval)


# -------------------------------- main --------------------------------

if __name__ == "__main__":
    bs, seq = 2, 8

    key = jax.random.PRNGKey(0)
    k_w, k_ids = jax.random.split(key, 2)

    # Pretrained embedding weights (from_pretrained keeps row 0 as given).
    embed_weights = jax.random.normal(k_w, (VOCAB, D_MODEL), jnp.float32)

    token_ids = jax.random.randint(k_ids, (bs, seq), 0, VOCAB, dtype=jnp.int32)
    token_ids = token_ids.at[0, 0].set(0)              # include a padding-idx token

    pos_table = make_position_encoding(MAX_LEN, D_MODEL)

    out = embedding_forward(token_ids, embed_weights, pos_table)
    out = jax.block_until_ready(out)

    ref = ref_forward(token_ids, embed_weights, pos_table)
    assert out.shape == (bs, seq, D_MODEL)
    assert jnp.allclose(out, ref, atol=1e-5, rtol=1e-5), \
        f"max abs err = {jnp.max(jnp.abs(out - ref))}"

    print("KERNEL_OK")
</pallas_src>

<mosaic_0001>
module attributes {stable_mosaic.version = 11 : i64} {
  func.func @embedding_kernel(%arg0: memref<16xi32, #tpu.memory_space<smem>>, %arg1: memref<128x32xf32, #tpu.memory_space<vmem>>, %arg2: memref<8x32xf32, #tpu.memory_space<vmem>>, %arg3: memref<16x32xf32, #tpu.memory_space<vmem>>) attributes {dimension_semantics = [], scalar_prefetch = 0 : i64, scratch_operands = 0 : i64, tpu.core_type = #tpu.core_type<tc>} {
    %c0 = arith.constant 0 : index
    %0 = memref.load %arg0[%c0] : memref<16xi32, #tpu.memory_space<smem>>
    %1 = arith.index_cast %0 : i32 to index
    %c0_0 = arith.constant 0 : index
    %2 = vector.load %arg1[%1, %c0_0] : memref<128x32xf32, #tpu.memory_space<vmem>>, vector<1x32xf32>
    %cst = arith.constant 5.65685415 : f32
    %3 = vector.broadcast %cst : f32 to vector<1x32xf32>
    %4 = arith.mulf %2, %3 : vector<1x32xf32>
    %c0_1 = arith.constant 0 : index
    %c0_2 = arith.constant 0 : index
    %5 = vector.load %arg2[%c0_1, %c0_2] : memref<8x32xf32, #tpu.memory_space<vmem>>, vector<1x32xf32>
    %6 = arith.addf %4, %5 : vector<1x32xf32>
    %c0_3 = arith.constant 0 : index
    %c0_4 = arith.constant 0 : index
    %7 = vector.load %arg3[%c0_3, %c0_4] : memref<16x32xf32, #tpu.memory_space<vmem>>, vector<1x32xf32>
    tpu.vector_store %arg3[%c0_3, %c0_4], %6 {strides = array<i32>} : memref<16x32xf32, #tpu.memory_space<vmem>>, vector<1x32xf32>,
    %c1 = arith.constant 1 : index
    %8 = memref.load %arg0[%c1] : memref<16xi32, #tpu.memory_space<smem>>
    %9 = arith.index_cast %8 : i32 to index
    %c0_5 = arith.constant 0 : index
    %10 = vector.load %arg1[%9, %c0_5] : memref<128x32xf32, #tpu.memory_space<vmem>>, vector<1x32xf32>
    %cst_6 = arith.constant 5.65685415 : f32
    %11 = vector.broadcast %cst_6 : f32 to vector<1x32xf32>
    %12 = arith.mulf %10, %11 : vector<1x32xf32>
    %c1_7 = arith.constant 1 : index
    %c0_8 = arith.constant 0 : index
    %13 = vector.load %arg2[%c1_7, %c0_8] : memref<8x32xf32, #tpu.memory_space<vmem>>, vector<1x32xf32>
    %14 = arith.addf %12, %13 : vector<1x32xf32>
    %c1_9 = arith.constant 1 : index
    %c0_10 = arith.constant 0 : index
    %15 = vector.load %arg3[%c1_9, %c0_10] : memref<16x32xf32, #tpu.memory_space<vmem>>, vector<1x32xf32>
    tpu.vector_store %arg3[%c1_9, %c0_10], %14 {strides = array<i32>} : memref<16x32xf32, #tpu.memory_space<vmem>>, vector<1x32xf32>,
    %c2 = arith.constant 2 : index
    %16 = memref.load %arg0[%c2] : memref<16xi32, #tpu.memory_space<smem>>
    %17 = arith.index_cast %16 : i32 to index
    %c0_11 = arith.constant 0 : index
    %18 = vector.load %arg1[%17, %c0_11] : memref<128x32xf32, #tpu.memory_space<vmem>>, vector<1x32xf32>
    %cst_12 = arith.constant 5.65685415 : f32
    %19 = vector.broadcast %cst_12 : f32 to vector<1x32xf32>
    %20 = arith.mulf %18, %19 : vector<1x32xf32>
    %c2_13 = arith.constant 2 : index
    %c0_14 = arith.constant 0 : index
    %21 = vector.load %arg2[%c2_13, %c0_14] : memref<8x32xf32, #tpu.memory_space<vmem>>, vector<1x32xf32>
    %22 = arith.addf %20, %21 : vector<1x32xf32>
    %c2_15 = arith.constant 2 : index
    %c0_16 = arith.constant 0 : index
    %23 = vector.load %arg3[%c2_15, %c0_16] : memref<16x32xf32, #tpu.memory_space<vmem>>, vector<1x32xf32>
    tpu.vector_store %arg3[%c2_15, %c0_16], %22 {strides = array<i32>} : memref<16x32xf32, #tpu.memory_space<vmem>>, vector<1x32xf32>,
    %c3 = arith.constant 3 : index
    %24 = memref.load %arg0[%c3] : memref<16xi32, #tpu.memory_space<smem>>
    %25 = arith.index_cast %24 : i32 to index
    %c0_17 = arith.constant 0 : index
    %26 = vector.load %arg1[%25, %c0_17] : memref<128x32xf32, #tpu.memory_space<vmem>>, vector<1x32xf32>
    %cst_18 = arith.constant 5.65685415 : f32
    %27 = vector.broadcast %cst_18 : f32 to vector<1x32xf32>
    %28 = arith.mulf %26, %27 : vector<1x32xf32>
    %c3_19 = arith.constant 3 : index
    %c0_20 = arith.constant 0 : index
    %29 = vector.load %arg2[%c3_19, %c0_20] : memref<8x32xf32, #tpu.memory_space<vmem>>, vector<1x32xf32>
    %30 = arith.addf %28, %29 : vector<1x32xf32>
    %c3_21 = arith.constant 3 : index
    %c0_22 = arith.constant 0 : index
    %31 = vector.load %arg3[%c3_21, %c0_22] : memref<16x32xf32, #tpu.memory_space<vmem>>, vector<1x32xf32>
    tpu.vector_store %arg3[%c3_21, %c0_22], %30 {strides = array<i32>} : memref<16x32xf32, #tpu.memory_space<vmem>>, vector<1x32xf32>,
    %c4 = arith.constant 4 : index
    %32 = memref.load %arg0[%c4] : memref<16xi32, #tpu.memory_space<smem>>
    %33 = arith.index_cast %32 : i32 to index
    %c0_23 = arith.constant 0 : index
    %34 = vector.load %arg1[%33, %c0_23] : memref<128x32xf32, #tpu.memory_space<vmem>>, vector<1x32xf32>
    %cst_24 = arith.constant 5.65685415 : f32
    %35 = vector.broadcast %cst_24 : f32 to vector<1x32xf32>
    %36 = arith.mulf %34, %35 : vector<1x32xf32>
    %c4_25 = arith.constant 4 : index
    %c0_26 = arith.constant 0 : index
    %37 = vector.load %arg2[%c4_25, %c0_26] : memref<8x32xf32, #tpu.memory_space<vmem>>, vector<1x32xf32>
    %38 = arith.addf %36, %37 : vector<1x32xf32>
    %c4_27 = arith.constant 4 : index
    %c0_28 = arith.constant 0 : index
    %39 = vector.load %arg3[%c4_27, %c0_28] : memref<16x32xf32, #tpu.memory_space<vmem>>, vector<1x32xf32>
    tpu.vector_store %arg3[%c4_27, %c0_28], %38 {strides = array<i32>} : memref<16x32xf32, #tpu.memory_space<vmem>>, vector<1x32xf32>,
    %c5 = arith.constant 5 : index
    %40 = memref.load %arg0[%c5] : memref<16xi32, #tpu.memory_space<smem>>
    %41 = arith.index_cast %40 : i32 to index
    %c0_29 = arith.constant 0 : index
    %42 = vector.load %arg1[%41, %c0_29] : memref<128x32xf32, #tpu.memory_space<vmem>>, vector<1x32xf32>
    %cst_30 = arith.constant 5.65685415 : f32
    %43 = vector.broadcast %cst_30 : f32 to vector<1x32xf32>
    %44 = arith.mulf %42, %43 : vector<1x32xf32>
    %c5_31 = arith.constant 5 : index
    %c0_32 = arith.constant 0 : index
    %45 = vector.load %arg2[%c5_31, %c0_32] : memref<8x32xf32, #tpu.memory_space<vmem>>, vector<1x32xf32>
    %46 = arith.addf %44, %45 : vector<1x32xf32>
    %c5_33 = arith.constant 5 : index
    %c0_34 = arith.constant 0 : index
    %47 = vector.load %arg3[%c5_33, %c0_34] : memref<16x32xf32, #tpu.memory_space<vmem>>, vector<1x32xf32>
    tpu.vector_store %arg3[%c5_33, %c0_34], %46 {strides = array<i32>} : memref<16x32xf32, #tpu.memory_space<vmem>>, vector<1x32xf32>,
    %c6 = arith.constant 6 : index
    %48 = memref.load %arg0[%c6] : memref<16xi32, #tpu.memory_space<smem>>
    %49 = arith.index_cast %48 : i32 to index
    %c0_35 = arith.constant 0 : index
    %50 = vector.load %arg1[%49, %c0_35] : memref<128x32xf32, #tpu.memory_space<vmem>>, vector<1x32xf32>
    %cst_36 = arith.constant 5.65685415 : f32
    %51 = vector.broadcast %cst_36 : f32 to vector<1x32xf32>
    %52 = arith.mulf %50, %51 : vector<1x32xf32>
    %c6_37 = arith.constant 6 : index
    %c0_38 = arith.constant 0 : index
    %53 = vector.load %arg2[%c6_37, %c0_38] : memref<8x32xf32, #tpu.memory_space<vmem>>, vector<1x32xf32>
    %54 = arith.addf %52, %53 : vector<1x32xf32>
    %c6_39 = arith.constant 6 : index
    %c0_40 = arith.constant 0 : index
    %55 = vector.load %arg3[%c6_39, %c0_40] : memref<16x32xf32, #tpu.memory_space<vmem>>, vector<1x32xf32>
    tpu.vector_store %arg3[%c6_39, %c0_40], %54 {strides = array<i32>} : memref<16x32xf32, #tpu.memory_space<vmem>>, vector<1x32xf32>,
    %c7 = arith.constant 7 : index
    %56 = memref.load %arg0[%c7] : memref<16xi32, #tpu.memory_space<smem>>
    %57 = arith.index_cast %56 : i32 to index
    %c0_41 = arith.constant 0 : index
    %58 = vector.load %arg1[%57, %c0_41] : memref<128x32xf32, #tpu.memory_space<vmem>>, vector<1x32xf32>
    %cst_42 = arith.constant 5.65685415 : f32
    %59 = vector.broadcast %cst_42 : f32 to vector<1x32xf32>
    %60 = arith.mulf %58, %59 : vector<1x32xf32>
    %c7_43 = arith.constant 7 : index
    %c0_44 = arith.constant 0 : index
    %61 = vector.load %arg2[%c7_43, %c0_44] : memref<8x32xf32, #tpu.memory_space<vmem>>, vector<1x32xf32>
    %62 = arith.addf %60, %61 : vector<1x32xf32>
    %c7_45 = arith.constant 7 : index
    %c0_46 = arith.constant 0 : index
    %63 = vector.load %arg3[%c7_45, %c0_46] : memref<16x32xf32, #tpu.memory_space<vmem>>, vector<1x32xf32>
    tpu.vector_store %arg3[%c7_45, %c0_46], %62 {strides = array<i32>} : memref<16x32xf32, #tpu.memory_space<vmem>>, vector<1x32xf32>,
    %c8 = arith.constant 8 : index
    %64 = memref.load %arg0[%c8] : memref<16xi32, #tpu.memory_space<smem>>
    %65 = arith.index_cast %64 : i32 to index
    %c0_47 = arith.constant 0 : index
    %66 = vector.load %arg1[%65, %c0_47] : memref<128x32xf32, #tpu.memory_space<vmem>>, vector<1x32xf32>
    %cst_48 = arith.constant 5.65685415 : f32
    %67 = vector.broadcast %cst_48 : f32 to vector<1x32xf32>
    %68 = arith.mulf %66, %67 : vector<1x32xf32>
    %c0_49 = arith.constant 0 : index
    %c0_50 = arith.constant 0 : index
    %69 = vector.load %arg2[%c0_49, %c0_50] : memref<8x32xf32, #tpu.memory_space<vmem>>, vector<1x32xf32>
    %70 = arith.addf %68, %69 : vector<1x32xf32>
    %c8_51 = arith.constant 8 : index
    %c0_52 = arith.constant 0 : index
    %71 = vector.load %arg3[%c8_51, %c0_52] : memref<16x32xf32, #tpu.memory_space<vmem>>, vector<1x32xf32>
    tpu.vector_store %arg3[%c8_51, %c0_52], %70 {strides = array<i32>} : memref<16x32xf32, #tpu.memory_space<vmem>>, vector<1x32xf32>,
    %c9 = arith.constant 9 : index
    %72 = memref.load %arg0[%c9] : memref<16xi32, #tpu.memory_space<smem>>
    %73 = arith.index_cast %72 : i32 to index
    %c0_53 = arith.constant 0 : index
    %74 = vector.load %arg1[%73, %c0_53] : memref<128x32xf32, #tpu.memory_space<vmem>>, vector<1x32xf32>
    %cst_54 = arith.constant 5.65685415 : f32
    %75 = vector.broadcast %cst_54 : f32 to vector<1x32xf32>
    %76 = arith.mulf %74, %75 : vector<1x32xf32>
    %c1_55 = arith.constant 1 : index
    %c0_56 = arith.constant 0 : index
    %77 = vector.load %arg2[%c1_55, %c0_56] : memref<8x32xf32, #tpu.memory_space<vmem>>, vector<1x32xf32>
    %78 = arith.addf %76, %77 : vector<1x32xf32>
    %c9_57 = arith.constant 9 : index
    %c0_58 = arith.constant 0 : index
    %79 = vector.load %arg3[%c9_57, %c0_58] : memref<16x32xf32, #tpu.memory_space<vmem>>, vector<1x32xf32>
    tpu.vector_store %arg3[%c9_57, %c0_58], %78 {strides = array<i32>} : memref<16x32xf32, #tpu.memory_space<vmem>>, vector<1x32xf32>,
    %c10 = arith.constant 10 : index
    %80 = memref.load %arg0[%c10] : memref<16xi32, #tpu.memory_space<smem>>
    %81 = arith.index_cast %80 : i32 to index
    %c0_59 = arith.constant 0 : index
    %82 = vector.load %arg1[%81, %c0_59] : memref<128x32xf32, #tpu.memory_space<vmem>>, vector<1x32xf32>
    %cst_60 = arith.constant 5.65685415 : f32
    %83 = vector.broadcast %cst_60 : f32 to vector<1x32xf32>
    %84 = arith.mulf %82, %83 : vector<1x32xf32>
    %c2_61 = arith.constant 2 : index
    %c0_62 = arith.constant 0 : index
    %85 = vector.load %arg2[%c2_61, %c0_62] : memref<8x32xf32, #tpu.memory_space<vmem>>, vector<1x32xf32>
    %86 = arith.addf %84, %85 : vector<1x32xf32>
    %c10_63 = arith.constant 10 : index
    %c0_64 = arith.constant 0 : index
    %87 = vector.load %arg3[%c10_63, %c0_64] : memref<16x32xf32, #tpu.memory_space<vmem>>, vector<1x32xf32>
    tpu.vector_store %arg3[%c10_63, %c0_64], %86 {strides = array<i32>} : memref<16x32xf32, #tpu.memory_space<vmem>>, vector<1x32xf32>,
    %c11 = arith.constant 11 : index
    %88 = memref.load %arg0[%c11] : memref<16xi32, #tpu.memory_space<smem>>
    %89 = arith.index_cast %88 : i32 to index
    %c0_65 = arith.constant 0 : index
    %90 = vector.load %arg1[%89, %c0_65] : memref<128x32xf32, #tpu.memory_space<vmem>>, vector<1x32xf32>
    %cst_66 = arith.constant 5.65685415 : f32
    %91 = vector.broadcast %cst_66 : f32 to vector<1x32xf32>
    %92 = arith.mulf %90, %91 : vector<1x32xf32>
    %c3_67 = arith.constant 3 : index
    %c0_68 = arith.constant 0 : index
    %93 = vector.load %arg2[%c3_67, %c0_68] : memref<8x32xf32, #tpu.memory_space<vmem>>, vector<1x32xf32>
    %94 = arith.addf %92, %93 : vector<1x32xf32>
    %c11_69 = arith.constant 11 : index
    %c0_70 = arith.constant 0 : index
    %95 = vector.load %arg3[%c11_69, %c0_70] : memref<16x32xf32, #tpu.memory_space<vmem>>, vector<1x32xf32>
    tpu.vector_store %arg3[%c11_69, %c0_70], %94 {strides = array<i32>} : memref<16x32xf32, #tpu.memory_space<vmem>>, vector<1x32xf32>,
    %c12 = arith.constant 12 : index
    %96 = memref.load %arg0[%c12] : memref<16xi32, #tpu.memory_space<smem>>
    %97 = arith.index_cast %96 : i32 to index
    %c0_71 = arith.constant 0 : index
    %98 = vector.load %arg1[%97, %c0_71] : memref<128x32xf32, #tpu.memory_space<vmem>>, vector<1x32xf32>
    %cst_72 = arith.constant 5.65685415 : f32
    %99 = vector.broadcast %cst_72 : f32 to vector<1x32xf32>
    %100 = arith.mulf %98, %99 : vector<1x32xf32>
    %c4_73 = arith.constant 4 : index
    %c0_74 = arith.constant 0 : index
    %101 = vector.load %arg2[%c4_73, %c0_74] : memref<8x32xf32, #tpu.memory_space<vmem>>, vector<1x32xf32>
    %102 = arith.addf %100, %101 : vector<1x32xf32>
    %c12_75 = arith.constant 12 : index
    %c0_76 = arith.constant 0 : index
    %103 = vector.load %arg3[%c12_75, %c0_76] : memref<16x32xf32, #tpu.memory_space<vmem>>, vector<1x32xf32>
    tpu.vector_store %arg3[%c12_75, %c0_76], %102 {strides = array<i32>} : memref<16x32xf32, #tpu.memory_space<vmem>>, vector<1x32xf32>,
    %c13 = arith.constant 13 : index
    %104 = memref.load %arg0[%c13] : memref<16xi32, #tpu.memory_space<smem>>
    %105 = arith.index_cast %104 : i32 to index
    %c0_77 = arith.constant 0 : index
    %106 = vector.load %arg1[%105, %c0_77] : memref<128x32xf32, #tpu.memory_space<vmem>>, vector<1x32xf32>
    %cst_78 = arith.constant 5.65685415 : f32
    %107 = vector.broadcast %cst_78 : f32 to vector<1x32xf32>
    %108 = arith.mulf %106, %107 : vector<1x32xf32>
    %c5_79 = arith.constant 5 : index
    %c0_80 = arith.constant 0 : index
    %109 = vector.load %arg2[%c5_79, %c0_80] : memref<8x32xf32, #tpu.memory_space<vmem>>, vector<1x32xf32>
    %110 = arith.addf %108, %109 : vector<1x32xf32>
    %c13_81 = arith.constant 13 : index
    %c0_82 = arith.constant 0 : index
    %111 = vector.load %arg3[%c13_81, %c0_82] : memref<16x32xf32, #tpu.memory_space<vmem>>, vector<1x32xf32>
    tpu.vector_store %arg3[%c13_81, %c0_82], %110 {strides = array<i32>} : memref<16x32xf32, #tpu.memory_space<vmem>>, vector<1x32xf32>,
    %c14 = arith.constant 14 : index
    %112 = memref.load %arg0[%c14] : memref<16xi32, #tpu.memory_space<smem>>
    %113 = arith.index_cast %112 : i32 to index
    %c0_83 = arith.constant 0 : index
    %114 = vector.load %arg1[%113, %c0_83] : memref<128x32xf32, #tpu.memory_space<vmem>>, vector<1x32xf32>
    %cst_84 = arith.constant 5.65685415 : f32
    %115 = vector.broadcast %cst_84 : f32 to vector<1x32xf32>
    %116 = arith.mulf %114, %115 : vector<1x32xf32>
    %c6_85 = arith.constant 6 : index
    %c0_86 = arith.constant 0 : index
    %117 = vector.load %arg2[%c6_85, %c0_86] : memref<8x32xf32, #tpu.memory_space<vmem>>, vector<1x32xf32>
    %118 = arith.addf %116, %117 : vector<1x32xf32>
    %c14_87 = arith.constant 14 : index
    %c0_88 = arith.constant 0 : index
    %119 = vector.load %arg3[%c14_87, %c0_88] : memref<16x32xf32, #tpu.memory_space<vmem>>, vector<1x32xf32>
    tpu.vector_store %arg3[%c14_87, %c0_88], %118 {strides = array<i32>} : memref<16x32xf32, #tpu.memory_space<vmem>>, vector<1x32xf32>,
    %c15 = arith.constant 15 : index
    %120 = memref.load %arg0[%c15] : memref<16xi32, #tpu.memory_space<smem>>
    %121 = arith.index_cast %120 : i32 to index
    %c0_89 = arith.constant 0 : index
    %122 = vector.load %arg1[%121, %c0_89] : memref<128x32xf32, #tpu.memory_space<vmem>>, vector<1x32xf32>
    %cst_90 = arith.constant 5.65685415 : f32
    %123 = vector.broadcast %cst_90 : f32 to vector<1x32xf32>
    %124 = arith.mulf %122, %123 : vector<1x32xf32>
    %c7_91 = arith.constant 7 : index
    %c0_92 = arith.constant 0 : index
    %125 = vector.load %arg2[%c7_91, %c0_92] : memref<8x32xf32, #tpu.memory_space<vmem>>, vector<1x32xf32>
    %126 = arith.addf %124, %125 : vector<1x32xf32>
    %c15_93 = arith.constant 15 : index
    %c0_94 = arith.constant 0 : index
    %127 = vector.load %arg3[%c15_93, %c0_94] : memref<16x32xf32, #tpu.memory_space<vmem>>, vector<1x32xf32>
    tpu.vector_store %arg3[%c15_93, %c0_94], %126 {strides = array<i32>} : memref<16x32xf32, #tpu.memory_space<vmem>>, vector<1x32xf32>,
    return
  }
}

</mosaic_0001>

<llo_original>
// kernel: tpu_custom_call.1
$region0: #{tpu_custom_call.1}
  #allocation0 [shape = 'u32[]', space=smem, size = 0x4, offset = 0x4, fixed_abs, tag = 'smem constant byte address 0x4 - core index']
  #allocation1 [shape = 'u32[144,128]{1,0:T(1,128)}', space=vmem, size = 0x12000, scoped, tag = 'internal scratch']
  %s0 = inlined_call_operand.vmem [shape: s32[16], index: 0, kind: input, shape index: {}]
  %s1 = inlined_call_operand.vmem [shape: f32[128,32], index: 1, kind: input, shape index: {}]
  %s2 = inlined_call_operand.vmem [shape: f32[8,32], index: 2, kind: input, shape index: {}]
  %s3 = inlined_call_operand.hbm [shape: f32[16,32], index: 3, kind: output, shape index: {}]
  %s4 = sld [smem:[#allocation0]]
  $region26: #{tpu_custom_call.1} parent=0
    _
  %s6 = ssub.s32 1, %s4
  %s7 = scalar_select 0, %s6, %s4
  $region1: #{tpu_custom_call.1} parent=0
    #allocation2 [shape = 'u8[512]{0}', space=smem, size = 0x200, scoped, tag = 'input window, operand 0, single buffered']
    #allocation3 [shape = 's32[1]{0}', space=sflag, size = 0x4, scoped, tag = 'scoped memory for tpu_custom_call.1']
    #allocation4 [shape = 's32[1]{0}', space=sflag, size = 0x4, scoped, tag = 'scoped memory for tpu_custom_call.1']
    #allocation5 [shape = 'u8[8192]{0}', space=vmem, size = 0x2000, scoped, tag = 'output window, operand 0, single buffered']
    %8 = vsyncpa [#allocation4], 0
    %9 = vsyncpa [#allocation3], 0
    // Predicated region
    $region2: #{tpu_custom_call.1} parent=1 // pred_check
      _
    $region3: #{tpu_custom_call.1} parent=1 // pred_check_branch
      %11 = sbr.rel (0) target = $region5
    $region4: #{tpu_custom_call.1} parent=1 // pred_region
      %s13 = ssub.s32 16, 16
      %14 = vsyncadd [#allocation4], %s13
      %s16 = sshll.u32 %s0, 4
      %s17 = int_to_ptr.vmem [resolvable:$true] %s16
      %19 = dma.vmem_to_smem %s17, 16, [#allocation2], [#allocation4]
    $region5: #{tpu_custom_call.1} parent=1 // pred_fallthru
      _
    // Predicated region
    $region6: #{tpu_custom_call.1} parent=1 // pred_check
      _
    $region7: #{tpu_custom_call.1} parent=1 // pred_check_branch
      %21 = sbr.rel (0) target = $region9
    $region8: #{tpu_custom_call.1} parent=1 // pred_region
      _
    $region9: #{tpu_custom_call.1} parent=1 // pred_fallthru
      _
    // Predicated region
    $region10: #{tpu_custom_call.1} parent=1 // pred_check
      _
    $region11: #{tpu_custom_call.1} parent=1 // pred_check_branch
      %23 = sbr.rel (0) target = $region13
    $region12: #{tpu_custom_call.1} parent=1 // pred_region
      _
    $region13: #{tpu_custom_call.1} parent=1 // pred_fallthru
      _
    // Predicated region
    $region14: #{tpu_custom_call.1} parent=1 // pred_check
      _
    $region15: #{tpu_custom_call.1} parent=1 // pred_check_branch
      %25 = sbr.rel (0) target = $region17
    $region16: #{tpu_custom_call.1} parent=1 // pred_region
      %26 = dma.done [#allocation4], 16
    $region17: #{tpu_custom_call.1} parent=1 // pred_fallthru
      _
    %27 = sfence
    %s28 = sld [smem:[#allocation2]]
    %s29 = scalar_lea.vmem %s1, %s28
    %v30 = vld [vmem:[%s29] sm:$0x1]
    %v31 = vmul.f32 %v30, 5.656854
    %v32 = vld [vmem:[%s2] sm:$0x1]
    %v33 = vadd.f32 %v31, %v32
    %vm34 = vcmask 253952
    %35 = vst.msk [vmem:[#allocation5] sm:$0x1] %vm34, %v33
    %s36 = sld [smem:[#allocation2 + $0x1]]
    %s37 = scalar_lea.vmem %s1, %s36
    %v38 = vld [vmem:[%s37] sm:$0x1]
    %v39 = vmul.f32 %v38, 5.656854
    %v40 = vld [vmem:[%s2 + $0x1] sm:$0x1]
    %v41 = vadd.f32 %v39, %v40
    %42 = vst.msk [vmem:[#allocation5 + $0x1] sm:$0x1] %vm34, %v41
    %s43 = sld [smem:[#allocation2 + $0x2]]
    %s44 = scalar_lea.vmem %s1, %s43
    %v45 = vld [vmem:[%s44] sm:$0x1]
    %v46 = vmul.f32 %v45, 5.656854
    %v47 = vld [vmem:[%s2 + $0x2] sm:$0x1]
    %v48 = vadd.f32 %v46, %v47
    %49 = vst.msk [vmem:[#allocation5 + $0x2] sm:$0x1] %vm34, %v48
    %s50 = sld [smem:[#allocation2 + $0x3]]
    %s51 = scalar_lea.vmem %s1, %s50
    %v52 = vld [vmem:[%s51] sm:$0x1]
    %v53 = vmul.f32 %v52, 5.656854
    %v54 = vld [vmem:[%s2 + $0x3] sm:$0x1]
    %v55 = vadd.f32 %v53, %v54
    %56 = vst.msk [vmem:[#allocation5 + $0x3] sm:$0x1] %vm34, %v55
    %s57 = sld [smem:[#allocation2 + $0x4]]
    %s58 = scalar_lea.vmem %s1, %s57
    %v59 = vld [vmem:[%s58] sm:$0x1]
    %v60 = vmul.f32 %v59, 5.656854
    %v61 = vld [vmem:[%s2 + $0x4] sm:$0x1]
    %v62 = vadd.f32 %v60, %v61
    %63 = vst.msk [vmem:[#allocation5 + $0x4] sm:$0x1] %vm34, %v62
    %s64 = sld [smem:[#allocation2 + $0x5]]
    %s65 = scalar_lea.vmem %s1, %s64
    %v66 = vld [vmem:[%s65] sm:$0x1]
    %v67 = vmul.f32 %v66, 5.656854
    %v68 = vld [vmem:[%s2 + $0x5] sm:$0x1]
    %v69 = vadd.f32 %v67, %v68
    %70 = vst.msk [vmem:[#allocation5 + $0x5] sm:$0x1] %vm34, %v69
    %s71 = sld [smem:[#allocation2 + $0x6]]
    %s72 = scalar_lea.vmem %s1, %s71
    %v73 = vld [vmem:[%s72] sm:$0x1]
    %v74 = vmul.f32 %v73, 5.656854
    %v75 = vld [vmem:[%s2 + $0x6] sm:$0x1]
    %v76 = vadd.f32 %v74, %v75
    %77 = vst.msk [vmem:[#allocation5 + $0x6] sm:$0x1] %vm34, %v76
    %s78 = sld [smem:[#allocation2 + $0x7]]
    %s79 = scalar_lea.vmem %s1, %s78
    %v80 = vld [vmem:[%s79] sm:$0x1]
    %v81 = vmul.f32 %v80, 5.656854
    %v82 = vld [vmem:[%s2 + $0x7] sm:$0x1]
    %v83 = vadd.f32 %v81, %v82
    %84 = vst.msk [vmem:[#allocation5 + $0x7] sm:$0x1] %vm34, %v83
    %s85 = sld [smem:[#allocation2 + $0x8]]
    %s86 = scalar_lea.vmem %s1, %s85
    %v87 = vld [vmem:[%s86] sm:$0x1]
    %v88 = vmul.f32 %v87, 5.656854
    %v89 = vld [vmem:[%s2] sm:$0x1]
    %v90 = vadd.f32 %v88, %v89
    %91 = vst.msk [vmem:[#allocation5 + $0x8] sm:$0x1] %vm34, %v90
    %s92 = sld [smem:[#allocation2 + $0x9]]
    %s93 = scalar_lea.vmem %s1, %s92
    %v94 = vld [vmem:[%s93] sm:$0x1]
    %v95 = vmul.f32 %v94, 5.656854
    %v96 = vld [vmem:[%s2 + $0x1] sm:$0x1]
    %v97 = vadd.f32 %v95, %v96
    %98 = vst.msk [vmem:[#allocation5 + $0x9] sm:$0x1] %vm34, %v97
    %s99 = sld [smem:[#allocation2 + $0xa]]
    %s100 = scalar_lea.vmem %s1, %s99
    %v101 = vld [vmem:[%s100] sm:$0x1]
    %v102 = vmul.f32 %v101, 5.656854
    %v103 = vld [vmem:[%s2 + $0x2] sm:$0x1]
    %v104 = vadd.f32 %v102, %v103
    %105 = vst.msk [vmem:[#allocation5 + $0xa] sm:$0x1] %vm34, %v104
    %s106 = sld [smem:[#allocation2 + $0xb]]
    %s107 = scalar_lea.vmem %s1, %s106
    %v108 = vld [vmem:[%s107] sm:$0x1]
    %v109 = vmul.f32 %v108, 5.656854
    %v110 = vld [vmem:[%s2 + $0x3] sm:$0x1]
    %v111 = vadd.f32 %v109, %v110
    %112 = vst.msk [vmem:[#allocation5 + $0xb] sm:$0x1] %vm34, %v111
    %s113 = sld [smem:[#allocation2 + $0xc]]
    %s114 = scalar_lea.vmem %s1, %s113
    %v115 = vld [vmem:[%s114] sm:$0x1]
    %v116 = vmul.f32 %v115, 5.656854
    %v117 = vld [vmem:[%s2 + $0x4] sm:$0x1]
    %v118 = vadd.f32 %v116, %v117
    %119 = vst.msk [vmem:[#allocation5 + $0xc] sm:$0x1] %vm34, %v118
    %s120 = sld [smem:[#allocation2 + $0xd]]
    %s121 = scalar_lea.vmem %s1, %s120
    %v122 = vld [vmem:[%s121] sm:$0x1]
    %v123 = vmul.f32 %v122, 5.656854
    %v124 = vld [vmem:[%s2 + $0x5] sm:$0x1]
    %v125 = vadd.f32 %v123, %v124
    %126 = vst.msk [vmem:[#allocation5 + $0xd] sm:$0x1] %vm34, %v125
    %s127 = sld [smem:[#allocation2 + $0xe]]
    %s128 = scalar_lea.vmem %s1, %s127
    %v129 = vld [vmem:[%s128] sm:$0x1]
    %v130 = vmul.f32 %v129, 5.656854
    %v131 = vld [vmem:[%s2 + $0x6] sm:$0x1]
    %v132 = vadd.f32 %v130, %v131
    %133 = vst.msk [vmem:[#allocation5 + $0xe] sm:$0x1] %vm34, %v132
    %s134 = sld [smem:[#allocation2 + $0xf]]
    %s135 = scalar_lea.vmem %s1, %s134
    %v136 = vld [vmem:[%s135] sm:$0x1]
    %v137 = vmul.f32 %v136, 5.656854
    %v138 = vld [vmem:[%s2 + $0x7] sm:$0x1]
    %v139 = vadd.f32 %v137, %v138
    %140 = vst.msk [vmem:[#allocation5 + $0xf] sm:$0x1] %vm34, %v139
    // Predicated region
    $region18: #{tpu_custom_call.1} parent=1 // pred_check
      _
    $region19: #{tpu_custom_call.1} parent=1 // pred_check_branch
      %142 = sbr.rel (0) target = $region21
    $region20: #{tpu_custom_call.1} parent=1 // pred_region
      %s144 = ssub.s32 256, 256
      %145 = vsyncadd [#allocation3], %s144
      %s146 = sshll.u32 [#allocation5], 4
      %s147 = int_to_ptr.vmem [resolvable:$true] %s146
      %152 = dma.vmem_to_hbm [thread:$0]  %s147, 256, %s3, [#allocation3], 128, 128, 8
    $region21: #{tpu_custom_call.1} parent=1 // pred_fallthru
      _
    // Predicated region
    $region22: #{tpu_custom_call.1} parent=1 // pred_check
      _
    $region23: #{tpu_custom_call.1} parent=1 // pred_check_branch
      %154 = sbr.rel (0) target = $region25
    $region24: #{tpu_custom_call.1} parent=1 // pred_region
      %155 = dma.done [#allocation3], 256
    $region25: #{tpu_custom_call.1} parent=1 // pred_fallthru
      _
    %156 = vsyncpa [#allocation3], 1
    %157 = vsyncpa [#allocation4], 1

</llo_original>
